<compile_context>
chip_gen: v7x
topology: tpu7x:2x2x1
jax: 0.10.0
libtpu: 0.0.40
codegen_flags: <defaults>
</compile_context>

<pallas_src>
import functools

import jax
import jax.numpy as jnp
from jax.experimental import pallas as pl
from jax.experimental.pallas import tpu as pltpu

SMOOTH = 0.0001


def _make_dice_kernel(d, tile_d, kt_pp, needs_mask):
    """Build the kernel with static shape constants closed over."""
    n_full_tiles = d // tile_d  # tiles that lie entirely inside [0, d)

    def kernel(x_ref, t_ref, num_ref, den_ref, num_acc, den_acc):
        p = pl.program_id(0)          # partial-sum part (parallel axis)
        k = pl.program_id(1)          # tile within the part (reduction axis)

        @pl.when(k == 0)
        def _init():
            num_acc[...] = jnp.zeros_like(num_acc)
            den_acc[...] = jnp.zeros_like(den_acc)

        # Cast to f32 in-register; inputs stream in their source dtype.
        x = x_ref[...].astype(jnp.float32)
        t = t_ref[...].astype(jnp.float32)

        if needs_mask:
            g = p * kt_pp + k         # unclamped global tile index along D

            @pl.when(g < n_full_tiles)
            def _full_tile():
                num_acc[...] += x * t
                den_acc[...] += x + t

            @pl.when(g >= n_full_tiles)
            def _tail_tile():
                col = jax.lax.broadcasted_iota(jnp.int32, x.shape, 1)
                valid = (g * tile_d + col) < d
                xm = jnp.where(valid, x, 0.0)
                tm = jnp.where(valid, t, 0.0)
                num_acc[...] += xm * tm
                den_acc[...] += xm + tm
        else:
            num_acc[...] += x * t
            den_acc[...] += x + t

        @pl.when(k == pl.num_programs(1) - 1)
        def _finalize():
            # One cross-lane reduction per part (XLU), not one per step.
            num_ref[...] = jnp.sum(num_acc[...], axis=1, keepdims=True)
            den_ref[...] = jnp.sum(den_acc[...], axis=1, keepdims=True)

    return kernel


@functools.partial(jax.jit, static_argnames=("tile_d", "num_parts"))
def binary_dice_loss(inputs, targets, tile_d=2048, num_parts=2):
    """JAX/Pallas equivalent of BinaryDiceLoss.forward(input, targets)."""
    n = targets.shape[0]
    x = inputs.reshape(n, -1)
    t = targets.reshape(n, -1)
    d = x.shape[1]

    # Bool refs are awkward on TPU; int8 keeps the 1-byte stream.
    if x.dtype == jnp.bool_:
        x = x.astype(jnp.int8)
    if t.dtype == jnp.bool_:
        t = t.astype(jnp.int8)

    # Tile the flattened feature axis.  A single full-width tile if the whole
    # row fits; otherwise lane-aligned tiles of width tile_d.
    if d <= tile_d:
        tile_d = d
    kt_total = pl.cdiv(d, tile_d)                # tiles along D
    num_parts = max(1, min(num_parts, kt_total))
    kt_pp = pl.cdiv(kt_total, num_parts)         # tiles per partial-sum part
    needs_mask = (d % tile_d != 0) or (kt_pp * num_parts != kt_total)

    grid = (num_parts, kt_pp)

    def in_map(p, k):
        # Clamp so the DMA never addresses past the last block; clamped
        # duplicate tiles are fully zeroed by the in-kernel mask.
        return (0, jnp.minimum(p * kt_pp + k, kt_total - 1))

    kernel = _make_dice_kernel(d, tile_d, kt_pp, needs_mask)

    num, den = pl.pallas_call(
        kernel,
        out_shape=(
            jax.ShapeDtypeStruct((num_parts, n, 1), jnp.float32),
            jax.ShapeDtypeStruct((num_parts, n, 1), jnp.float32),
        ),
        grid_spec=pltpu.PrefetchScalarGridSpec(
            num_scalar_prefetch=0,
            grid=grid,
            in_specs=[
                pl.BlockSpec((n, tile_d), in_map),
                pl.BlockSpec((n, tile_d), in_map),
            ],
            out_specs=[
                pl.BlockSpec((None, n, 1), lambda p, k: (p, 0, 0)),
                pl.BlockSpec((None, n, 1), lambda p, k: (p, 0, 0)),
            ],
            scratch_shapes=[
                pltpu.VMEM((n, tile_d), jnp.float32),
                pltpu.VMEM((n, tile_d), jnp.float32),
            ],
        ),
        compiler_params=pltpu.CompilerParams(
            dimension_semantics=("parallel", "arbitrary"),
        ),
    )(x, t)

    # Tiny epilogue in plain JAX: combine per-part partial sums, form dice.
    inter = jnp.sum(num[:, :, 0], axis=0)        # (n,)  sum(x * t)
    sums = jnp.sum(den[:, :, 0], axis=0)         # (n,)  sum(x) + sum(t)
    dice = (2.0 * inter + SMOOTH) / (sums + SMOOTH)
    return 1.0 - jnp.sum(dice) / n


def _reference_dice_loss(inputs, targets):
    n = targets.shape[0]
    x = inputs.reshape(n, -1).astype(jnp.float32)
    t = targets.reshape(n, -1).astype(jnp.float32)
    inter = jnp.sum(x * t, axis=1)
    dice = (2.0 * inter + SMOOTH) / (jnp.sum(x, axis=1) + jnp.sum(t, axis=1) + SMOOTH)
    return 1.0 - jnp.sum(dice) / n


if __name__ == "__main__":
    key = jax.random.PRNGKey(0)
    k1, k2, k3, k4 = jax.random.split(key, 4)

    # Case 1: small NCHW (batch=2, channels=4, 16x16), f32 probabilities and
    # f32 {0,1} targets; D = 1024 fits in a single tile.
    x1 = jax.nn.sigmoid(jax.random.normal(k1, (2, 4, 16, 16), dtype=jnp.float32))
    t1 = (jax.random.uniform(k2, (2, 4, 16, 16)) > 0.5).astype(jnp.float32)
    loss1 = jax.block_until_ready(binary_dice_loss(x1, t1))
    ref1 = _reference_dice_loss(x1, t1)
    assert jnp.allclose(loss1, ref1, atol=1e-5, rtol=1e-5), (loss1, ref1)

    # Case 2: non-tile-aligned D (3*17*19 = 969), bf16 inputs + int8 targets,
    # multi-part grid -> exercises tail masking, clamped duplicate tiles and
    # the per-part partial-sum combine.
    x2 = jax.nn.sigmoid(
        jax.random.normal(k3, (2, 3, 17, 19), dtype=jnp.float32)
    ).astype(jnp.bfloat16)
    t2 = (jax.random.uniform(k4, (2, 3, 17, 19)) > 0.5).astype(jnp.int8)
    loss2 = jax.block_until_ready(binary_dice_loss(x2, t2, tile_d=384, num_parts=2))
    ref2 = _reference_dice_loss(x2, t2)
    assert jnp.allclose(loss2, ref2, atol=1e-4, rtol=1e-4), (loss2, ref2)

    print("KERNEL_OK")
</pallas_src>

<mosaic_0001>
module attributes {stable_mosaic.version = 11 : i64} {
  func.func @kernel(%arg0: i32, %arg1: i32, %arg2: memref<2x1024xf32, #tpu.memory_space<vmem>>, %arg3: memref<2x1024xf32, #tpu.memory_space<vmem>>, %arg4: memref<1x2x1xf32, #tpu.memory_space<vmem>>, %arg5: memref<1x2x1xf32, #tpu.memory_space<vmem>>, %arg6: memref<2x1024xf32, #tpu.memory_space<vmem>>, %arg7: memref<2x1024xf32, #tpu.memory_space<vmem>>) attributes {dimension_semantics = [#tpu.dimension_semantics<parallel>, #tpu.dimension_semantics<arbitrary>], iteration_bounds = array<i64: 1, 1>, scalar_prefetch = 0 : i64, scratch_operands = 2 : i64, tpu.core_type = #tpu.core_type<tc>, window_params = [{transform_indices = @transform_0, window_bounds = array<i64: 2, 1024>}, {transform_indices = @transform_1, window_bounds = array<i64: 2, 1024>}, {transform_indices = @transform_2, window_bounds = array<i64: 1, 2, 1>}, {transform_indices = @transform_3, window_bounds = array<i64: 1, 2, 1>}]} {
    %c0_i32 = arith.constant 0 : i32
    %0 = arith.cmpi eq, %arg1, %c0_i32 : i32
    %1 = arith.extui %0 : i1 to i32
    %c0_i32_0 = arith.constant 0 : i32
    %2 = arith.cmpi ne, %1, %c0_i32_0 : i32
    scf.if %2 {
      %cst = arith.constant 0.000000e+00 : f32
      %16 = vector.broadcast %cst : f32 to vector<2x1024xf32>
      %c0_14 = arith.constant 0 : index
      %c0_15 = arith.constant 0 : index
      %17 = vector.load %arg6[%c0_14, %c0_15] : memref<2x1024xf32, #tpu.memory_space<vmem>>, vector<2x1024xf32>
      tpu.vector_store %arg6[%c0_14, %c0_15], %16 {strides = array<i32>} : memref<2x1024xf32, #tpu.memory_space<vmem>>, vector<2x1024xf32>,
      %cst_16 = arith.constant 0.000000e+00 : f32
      %18 = vector.broadcast %cst_16 : f32 to vector<2x1024xf32>
      %c0_17 = arith.constant 0 : index
      %c0_18 = arith.constant 0 : index
      %19 = vector.load %arg7[%c0_17, %c0_18] : memref<2x1024xf32, #tpu.memory_space<vmem>>, vector<2x1024xf32>
      tpu.vector_store %arg7[%c0_17, %c0_18], %18 {strides = array<i32>} : memref<2x1024xf32, #tpu.memory_space<vmem>>, vector<2x1024xf32>,
    } else {
    }
    %c0 = arith.constant 0 : index
    %c0_1 = arith.constant 0 : index
    %3 = vector.load %arg2[%c0, %c0_1] : memref<2x1024xf32, #tpu.memory_space<vmem>>, vector<2x1024xf32>
    %c0_2 = arith.constant 0 : index
    %c0_3 = arith.constant 0 : index
    %4 = vector.load %arg3[%c0_2, %c0_3] : memref<2x1024xf32, #tpu.memory_space<vmem>>, vector<2x1024xf32>
    %c0_4 = arith.constant 0 : index
    %c0_5 = arith.constant 0 : index
    %5 = vector.load %arg6[%c0_4, %c0_5] : memref<2x1024xf32, #tpu.memory_space<vmem>>, vector<2x1024xf32>
    %6 = arith.mulf %3, %4 : vector<2x1024xf32>
    %7 = arith.addf %5, %6 : vector<2x1024xf32>
    %c0_6 = arith.constant 0 : index
    %c0_7 = arith.constant 0 : index
    %8 = vector.load %arg6[%c0_6, %c0_7] : memref<2x1024xf32, #tpu.memory_space<vmem>>, vector<2x1024xf32>
    tpu.vector_store %arg6[%c0_6, %c0_7], %7 {strides = array<i32>} : memref<2x1024xf32, #tpu.memory_space<vmem>>, vector<2x1024xf32>,
    %c0_8 = arith.constant 0 : index
    %c0_9 = arith.constant 0 : index
    %9 = vector.load %arg7[%c0_8, %c0_9] : memref<2x1024xf32, #tpu.memory_space<vmem>>, vector<2x1024xf32>
    %10 = arith.addf %3, %4 : vector<2x1024xf32>
    %11 = arith.addf %9, %10 : vector<2x1024xf32>
    %c0_10 = arith.constant 0 : index
    %c0_11 = arith.constant 0 : index
    %12 = vector.load %arg7[%c0_10, %c0_11] : memref<2x1024xf32, #tpu.memory_space<vmem>>, vector<2x1024xf32>
    tpu.vector_store %arg7[%c0_10, %c0_11], %11 {strides = array<i32>} : memref<2x1024xf32, #tpu.memory_space<vmem>>, vector<2x1024xf32>,
    %c0_i32_12 = arith.constant 0 : i32
    %13 = arith.cmpi eq, %arg1, %c0_i32_12 : i32
    %14 = arith.extui %13 : i1 to i32
    %c0_i32_13 = arith.constant 0 : i32
    %15 = arith.cmpi ne, %14, %c0_i32_13 : i32
    scf.if %15 {
      %c0_14 = arith.constant 0 : index
      %c0_15 = arith.constant 0 : index
      %16 = vector.load %arg6[%c0_14, %c0_15] : memref<2x1024xf32, #tpu.memory_space<vmem>>, vector<2x1024xf32>
      %cst = arith.constant dense<0.000000e+00> : vector<2xf32>
      %17 = vector.multi_reduction <add>, %16, %cst [1] : vector<2x1024xf32> to vector<2xf32>
      %18 = vector.shape_cast %17 : vector<2xf32> to vector<2x1xf32>
      %c0_16 = arith.constant 0 : index
      %c0_17 = arith.constant 0 : index
      %c0_18 = arith.constant 0 : index
      %19 = vector.load %arg4[%c0_16, %c0_17, %c0_18] : memref<1x2x1xf32, #tpu.memory_space<vmem>>, vector<1x2x1xf32>
      %20 = vector.shape_cast %19 : vector<1x2x1xf32> to vector<2x1xf32>
      %21 = vector.shape_cast %18 : vector<2x1xf32> to vector<1x2x1xf32>
      tpu.vector_store %arg4[%c0_16, %c0_17, %c0_18], %21 {strides = array<i32>} : memref<1x2x1xf32, #tpu.memory_space<vmem>>, vector<1x2x1xf32>,
      %c0_19 = arith.constant 0 : index
      %c0_20 = arith.constant 0 : index
      %22 = vector.load %arg7[%c0_19, %c0_20] : memref<2x1024xf32, #tpu.memory_space<vmem>>, vector<2x1024xf32>
      %cst_21 = arith.constant dense<0.000000e+00> : vector<2xf32>
      %23 = vector.multi_reduction <add>, %22, %cst_21 [1] : vector<2x1024xf32> to vector<2xf32>
      %24 = vector.shape_cast %23 : vector<2xf32> to vector<2x1xf32>
      %c0_22 = arith.constant 0 : index
      %c0_23 = arith.constant 0 : index
      %c0_24 = arith.constant 0 : index
      %25 = vector.load %arg5[%c0_22, %c0_23, %c0_24] : memref<1x2x1xf32, #tpu.memory_space<vmem>>, vector<1x2x1xf32>
      %26 = vector.shape_cast %25 : vector<1x2x1xf32> to vector<2x1xf32>
      %27 = vector.shape_cast %24 : vector<2x1xf32> to vector<1x2x1xf32>
      tpu.vector_store %arg5[%c0_22, %c0_23, %c0_24], %27 {strides = array<i32>} : memref<1x2x1xf32, #tpu.memory_space<vmem>>, vector<1x2x1xf32>,
    } else {
    }
    return
  }
  func.func @transform_0(%arg0: i32, %arg1: i32) -> (i32, i32) {
    %c1_i32 = arith.constant 1 : i32
    %0 = arith.muli %arg0, %c1_i32 : i32
    %1 = arith.addi %0, %arg1 : i32
    %c0_i32 = arith.constant 0 : i32
    %2 = arith.minsi %1, %c0_i32 : i32
    %c0_i32_0 = arith.constant 0 : i32
    %c0_i32_1 = arith.constant 0 : i32
    return %c0_i32_0, %2 : i32, i32
  }
  func.func @transform_1(%arg0: i32, %arg1: i32) -> (i32, i32) {
    %c1_i32 = arith.constant 1 : i32
    %0 = arith.muli %arg0, %c1_i32 : i32
    %1 = arith.addi %0, %arg1 : i32
    %c0_i32 = arith.constant 0 : i32
    %2 = arith.minsi %1, %c0_i32 : i32
    %c0_i32_0 = arith.constant 0 : i32
    %c0_i32_1 = arith.constant 0 : i32
    return %c0_i32_0, %2 : i32, i32
  }
  func.func @transform_2(%arg0: i32, %arg1: i32) -> (i32, i32, i32) {
    %c0_i32 = arith.constant 0 : i32
    %c0_i32_0 = arith.constant 0 : i32
    %c0_i32_1 = arith.constant 0 : i32
    return %arg0, %c0_i32, %c0_i32_0 : i32, i32, i32
  }
  func.func @transform_3(%arg0: i32, %arg1: i32) -> (i32, i32, i32) {
    %c0_i32 = arith.constant 0 : i32
    %c0_i32_0 = arith.constant 0 : i32
    %c0_i32_1 = arith.constant 0 : i32
    return %arg0, %c0_i32, %c0_i32_0 : i32, i32, i32
  }
}

</mosaic_0001>

<llo_original>
// kernel: binary_dice_loss.1
$region0: #{binary_dice_loss.1}
  #allocation0 [shape = 'u32[]', space=smem, size = 0x4, offset = 0x4, fixed_abs, tag = 'smem constant byte address 0x4 - core index']
  #allocation1 [shape = 'u32[144,128]{1,0:T(1,128)}', space=vmem, size = 0x12000, scoped, tag = 'internal scratch']
  #allocation2 [shape = 'f32[2,1024]{1,0:T(2,128)}', space=vmem, size = 0x2000, scoped, tag = 'scratch operand']
  #allocation3 [shape = 'f32[2,1024]{1,0:T(2,128)}', space=vmem, size = 0x2000, scoped, tag = 'scratch operand']
  %s0 = inlined_call_operand.vmem [shape: f32[2,1024], index: 0, kind: input, shape index: {}]
  %s1 = inlined_call_operand.vmem [shape: f32[2,1024], index: 1, kind: input, shape index: {}]
  %s2 = inlined_call_operand.vmem [shape: f32[1,2,1], index: 2, kind: output, shape index: {0}]
  %s3 = inlined_call_operand.vmem [shape: f32[1,2,1], index: 3, kind: output, shape index: {1}]
  %4 = xla_tuple %s2, %s3
  %s5 = sld [smem:[#allocation0]]
  $region34: #{binary_dice_loss.1} parent=0
    _
  %s7 = ssub.s32 1, %s5
  %s8 = scalar_select 0, %s7, %s5
  // Predicated region
  $region2: #{binary_dice_loss.1} parent=0 // pred_check
    _
  $region3: #{binary_dice_loss.1} parent=0 // pred_check_branch
    %10 = sbr.rel (0) target = $region5
  $region4: #{binary_dice_loss.1} parent=0 // pred_region
    %s11 = sadd.s32 0, 0
    %p12 = scmp.lt.s32.totalorder %s11, 0
    %s13 = scalar_select %p12, %s11, 0
    %s14 = smul.u32 8, %s13
    %p15 = scmp.lt.s32.totalorder %s14, 7
    %s16 = scalar_select %p15, %s14, 7
    %s17 = smul.addr %s16, 2
    %s18 = scalar_lea.vmem %s0, %s17
    %s19 = sadd.s32 0, 0
    %p20 = scmp.lt.s32.totalorder %s19, 0
    %s21 = scalar_select %p20, %s19, 0
    %s22 = smul.u32 8, %s21
  $region5: #{binary_dice_loss.1} parent=0 // pred_fallthru
    _
  // Predicated region
  $region6: #{binary_dice_loss.1} parent=0 // pred_check
    _
  $region7: #{binary_dice_loss.1} parent=0 // pred_check_branch
    %24 = sbr.rel (0) target = $region9
  $region8: #{binary_dice_loss.1} parent=0 // pred_region
    %s25 = sadd.s32 0, 0
    %p26 = scmp.lt.s32.totalorder %s25, 0
    %s27 = scalar_select %p26, %s25, 0
    %s28 = smul.u32 8, %s27
    %p29 = scmp.lt.s32.totalorder %s28, 7
    %s30 = scalar_select %p29, %s28, 7
    %s31 = smul.addr %s30, 2
    %s32 = scalar_lea.vmem %s1, %s31
    %s33 = sadd.s32 0, 0
    %p34 = scmp.lt.s32.totalorder %s33, 0
    %s35 = scalar_select %p34, %s33, 0
    %s36 = smul.u32 8, %s35
  $region9: #{binary_dice_loss.1} parent=0 // pred_fallthru
    _
  %s37 = sadd.s32 0, 0
  %p38 = scmp.lt.s32.totalorder %s37, 0
  %s39 = scalar_select %p38, %s37, 0
  %s40 = smul.u32 8, %s39
  %p41 = scmp.lt.s32.totalorder %s40, 7
  %s42 = scalar_select %p41, %s40, 7
  %s43 = smul.addr %s42, 2
  %s44 = scalar_lea.vmem %s0, %s43
  %s45 = sadd.s32 0, 0
  %p46 = scmp.lt.s32.totalorder %s45, 0
  %s47 = scalar_select %p46, %s45, 0
  %s48 = smul.u32 8, %s47
  %p49 = scmp.lt.s32.totalorder %s48, 7
  %s50 = scalar_select %p49, %s48, 7
  %s51 = smul.addr %s50, 2
  %s52 = scalar_lea.vmem %s1, %s51
  %s53 = sadd.s32 0, 0
  %p54 = scmp.lt.s32.totalorder %s53, 0
  %s55 = scalar_select %p54, %s53, 0
  %s56 = smul.u32 8, %s55
  %p57 = scmp.lt.s32.totalorder %s56, 7
  %s58 = scalar_select %p57, %s56, 7
  %s59 = smul.addr %s58, 2
  %s60 = scalar_lea.vmem %s0, %s59
  %s61 = sadd.s32 0, 0
  %p62 = scmp.lt.s32.totalorder %s61, 0
  %s63 = scalar_select %p62, %s61, 0
  %s64 = smul.u32 8, %s63
  %s65 = sadd.s32 0, 0
  %p66 = scmp.lt.s32.totalorder %s65, 0
  %s67 = scalar_select %p66, %s65, 0
  %s68 = smul.u32 8, %s67
  %p69 = scmp.lt.s32.totalorder %s68, 7
  %s70 = scalar_select %p69, %s68, 7
  %s71 = smul.addr %s70, 2
  %s72 = scalar_lea.vmem %s1, %s71
  %s73 = sadd.s32 0, 0
  %p74 = scmp.lt.s32.totalorder %s73, 0
  %s75 = scalar_select %p74, %s73, 0
  %s76 = smul.u32 8, %s75
  %p77 = scmp.eq.s32.totalorder 0, 0
  // Predicated region
  $region10: #{binary_dice_loss.1} parent=0 // pred_check
    %p78 = pneg %p77
  $region11: #{binary_dice_loss.1} parent=0 // pred_check_branch
    %80 = sbr.rel (%p78) target = $region13
  $region12: #{binary_dice_loss.1} parent=0 // pred_region
    %81 = vst [vmem:[#allocation2] sm:$0xff] 0.0
    %82 = vst [vmem:[#allocation2 + $0x8] sm:$0xff] 0.0
    %83 = vst [vmem:[#allocation3] sm:$0xff] 0.0
    %84 = vst [vmem:[#allocation3 + $0x8] sm:$0xff] 0.0
  $region13: #{binary_dice_loss.1} parent=0 // pred_fallthru
    _
  %v85 = vld [vmem:[%s60] sm:$0xff]
  %v86 = vld [vmem:[%s60 + $0x8] sm:$0xff]
  %v87 = vld [vmem:[%s72] sm:$0xff]
  %v88 = vld [vmem:[%s72 + $0x8] sm:$0xff]
  %v89 = vld [vmem:[#allocation2] sm:$0xff]
  %v90 = vld [vmem:[#allocation2 + $0x8] sm:$0xff]
  %v91 = vmul.f32 %v85, %v87
  %v92 = vmul.f32 %v86, %v88
  %v93 = vadd.f32 %v89, %v91
  %v94 = vadd.f32 %v90, %v92
  %95 = vst [vmem:[#allocation2] sm:$0xff] %v93
  %96 = vst [vmem:[#allocation2 + $0x8] sm:$0xff] %v94
  %v97 = vld [vmem:[#allocation3] sm:$0xff]
  %v98 = vld [vmem:[#allocation3 + $0x8] sm:$0xff]
  %v99 = vadd.f32 %v85, %v87
  %v100 = vadd.f32 %v86, %v88
  %v101 = vadd.f32 %v97, %v99
  %v102 = vadd.f32 %v98, %v100
  %103 = vst [vmem:[#allocation3] sm:$0xff] %v101
  %104 = vst [vmem:[#allocation3 + $0x8] sm:$0xff] %v102
  // Predicated region
  $region14: #{binary_dice_loss.1} parent=0 // pred_check
    %p105 = pneg %p77
  $region15: #{binary_dice_loss.1} parent=0 // pred_check_branch
    %107 = sbr.rel (%p105) target = $region17
  $region16: #{binary_dice_loss.1} parent=0 // pred_region
    %v108 = vld [vmem:[#allocation2] sm:$0xff]
    %v109 = vld [vmem:[#allocation2 + $0x8] sm:$0xff]
    %v112 = vcombine.high %v108, %v108
    %v114 = vunpack.c.l.s4 1983009808
    %v115 = vunpack.c.0.s8 %v114
    %v116 = vlaneseq
    %v117 = vshrl.u32 %v116, 7
    %v118 = vsub.s32 %v115, %v117
    %v119 = vrot.slane %v108, %v118
    %v121 = vunpack.c.l.s4 1983009808
    %v122 = vunpack.c.0.s8 %v121
    %v123 = vlaneseq
    %v124 = vshrl.u32 %v123, 7
    %v125 = vsub.s32 %v122, %v124
    %v126 = vrot.slane %v112, %v125
    %v127 = vcombine.high %v119, %v119
    %v128 = vcombine.high %v126, %v126
    %v129 = vcombine.high %v109, %v109
    %v131 = vunpack.c.l.s4 1983009808
    %v132 = vunpack.c.0.s8 %v131
    %v133 = vlaneseq
    %v134 = vshrl.u32 %v133, 7
    %v135 = vsub.s32 %v132, %v134
    %v136 = vrot.slane %v109, %v135
    %v138 = vunpack.c.l.s4 1983009808
    %v139 = vunpack.c.0.s8 %v138
    %v140 = vlaneseq
    %v141 = vshrl.u32 %v140, 7
    %v142 = vsub.s32 %v139, %v141
    %v143 = vrot.slane %v129, %v142
    %v144 = vcombine.high %v136, %v136
    %v145 = vcombine.high %v143, %v143
    %vm154 = vcmask 1041408
    %v155 = vsel %vm154, %v119, 0.0
    %v156 = vsel %vm154, %v127, 0.0
    %v157 = vadd.f32 %v155, %v156
    %v158 = vsel %vm154, %v126, 0.0
    %v159 = vadd.f32 %v157, %v158
    %v160 = vsel %vm154, %v128, 0.0
    %v161 = vadd.f32 %v159, %v160
    %v162 = vsel %vm154, %v136, 0.0
    %v163 = vadd.f32 %v161, %v162
    %v164 = vsel %vm154, %v144, 0.0
    %v165 = vadd.f32 %v163, %v164
    %v166 = vsel %vm154, %v143, 0.0
    %v167 = vadd.f32 %v165, %v166
    %v168 = vsel %vm154, %v145, 0.0
    %v169 = vadd.f32 %v167, %v168
    %170 = vadd.xlane.f32.xlu0 %v169
    %v171 = vpop.xlane.xlu0 %170
    %vm172 = vcmask 1024
    %173 = vst.msk [vmem:[%s2] sm:$0x3] %vm172, %v171
    %v174 = vld [vmem:[#allocation3] sm:$0xff]
    %v175 = vld [vmem:[#allocation3 + $0x8] sm:$0xff]
    %v178 = vcombine.high %v174, %v174
    %v180 = vunpack.c.l.s4 1983009808
    %v181 = vunpack.c.0.s8 %v180
    %v182 = vlaneseq
    %v183 = vshrl.u32 %v182, 7
    %v184 = vsub.s32 %v181, %v183
    %v185 = vrot.slane %v174, %v184
    %v187 = vunpack.c.l.s4 1983009808
    %v188 = vunpack.c.0.s8 %v187
    %v189 = vlaneseq
    %v190 = vshrl.u32 %v189, 7
    %v191 = vsub.s32 %v188, %v190
    %v192 = vrot.slane %v178, %v191
    %v193 = vcombine.high %v185, %v185
    %v194 = vcombine.high %v192, %v192
    %v195 = vcombine.high %v175, %v175
    %v197 = vunpack.c.l.s4 1983009808
    %v198 = vunpack.c.0.s8 %v197
    %v199 = vlaneseq
    %v200 = vshrl.u32 %v199, 7
    %v201 = vsub.s32 %v198, %v200
    %v202 = vrot.slane %v175, %v201
    %v204 = vunpack.c.l.s4 1983009808
    %v205 = vunpack.c.0.s8 %v204
    %v206 = vlaneseq
    %v207 = vshrl.u32 %v206, 7
    %v208 = vsub.s32 %v205, %v207
    %v209 = vrot.slane %v195, %v208
    %v210 = vcombine.high %v202, %v202
    %v211 = vcombine.high %v209, %v209
    %v220 = vsel %vm154, %v185, 0.0
    %v221 = vsel %vm154, %v193, 0.0
    %v222 = vadd.f32 %v220, %v221
    %v223 = vsel %vm154, %v192, 0.0
    %v224 = vadd.f32 %v222, %v223
    %v225 = vsel %vm154, %v194, 0.0
    %v226 = vadd.f32 %v224, %v225
    %v227 = vsel %vm154, %v202, 0.0
    %v228 = vadd.f32 %v226, %v227
    %v229 = vsel %vm154, %v210, 0.0
    %v230 = vadd.f32 %v228, %v229
    %v231 = vsel %vm154, %v209, 0.0
    %v232 = vadd.f32 %v230, %v231
    %v233 = vsel %vm154, %v211, 0.0
    %v234 = vadd.f32 %v232, %v233
    %235 = vadd.xlane.f32.xlu0 %v234
    %v236 = vpop.xlane.xlu0 %235
    %237 = vst.msk [vmem:[%s3] sm:$0x3] %vm172, %v236
  $region17: #{binary_dice_loss.1} parent=0 // pred_fallthru
    _
  // Predicated region
  $region18: #{binary_dice_loss.1} parent=0 // pred_check
    _
  $region19: #{binary_dice_loss.1} parent=0 // pred_check_branch
    %239 = sbr.rel (0) target = $region21
  $region20: #{binary_dice_loss.1} parent=0 // pred_region
    _
  $region21: #{binary_dice_loss.1} parent=0 // pred_fallthru
    _
  // Predicated region
  $region22: #{binary_dice_loss.1} parent=0 // pred_check
    _
  $region23: #{binary_dice_loss.1} parent=0 // pred_check_branch
    %241 = sbr.rel (0) target = $region25
  $region24: #{binary_dice_loss.1} parent=0 // pred_region
    _
  $region25: #{binary_dice_loss.1} parent=0 // pred_fallthru
    _
  // Predicated region
  $region26: #{binary_dice_loss.1} parent=0 // pred_check
    _
  $region27: #{binary_dice_loss.1} parent=0 // pred_check_branch
    %243 = sbr.rel (0) target = $region29
  $region28: #{binary_dice_loss.1} parent=0 // pred_region
    _
  $region29: #{binary_dice_loss.1} parent=0 // pred_fallthru
    _
  // Predicated region
  $region30: #{binary_dice_loss.1} parent=0 // pred_check
    _
  $region31: #{binary_dice_loss.1} parent=0 // pred_check_branch
    %245 = sbr.rel (0) target = $region33
  $region32: #{binary_dice_loss.1} parent=0 // pred_region
    _
  $region33: #{binary_dice_loss.1} parent=0 // pred_fallthru
    _

</llo_original>
